<compile_context>
chip_gen: v7x
topology: tpu7x:2x2x1
jax: 0.10.0
libtpu: 0.0.40
codegen_flags: <defaults>
</compile_context>

<pallas_src>
import functools

import jax
import jax.numpy as jnp
from jax.experimental import pallas as pl
from jax.experimental.pallas import tpu as pltpu

LANES = 128
SUBLANES = 8


def _tversky_kernel(alpha, beta, smooth, pad_correction,
                    p_ref, t_ref, out_ref, sp_acc, st_acc, tp_acc):
    i = pl.program_id(0)

    @pl.when(i == 0)
    def _init():
        sp_acc[...] = jnp.zeros_like(sp_acc)
        st_acc[...] = jnp.zeros_like(st_acc)
        tp_acc[...] = jnp.zeros_like(tp_acc)

    block_rows = p_ref.shape[0]
    groups = block_rows // SUBLANES

    # Cast to f32 in-kernel (inputs stay in native dtype in HBM).
    p = jax.nn.sigmoid(p_ref[...].astype(jnp.float32))
    t = t_ref[...].astype(jnp.float32)

    # Keep the hot loop as pure VPU adds on (8, 128) vreg slabs; defer all
    # XLU (cross-sublane / cross-lane) reductions to the finalize.
    p3 = p.reshape(groups, SUBLANES, LANES)
    t3 = t.reshape(groups, SUBLANES, LANES)

    sp_acc[...] += jnp.sum(p3, axis=0)          # partial sum(p)
    st_acc[...] += jnp.sum(t3, axis=0)          # partial sum(t)
    tp_acc[...] += jnp.sum(p3 * t3, axis=0)     # partial sum(p*t) (true pos)

    @pl.when(i == pl.num_programs(0) - 1)
    def _finalize():
        # Exact static correction for zero-padded tail: each padded element
        # contributes sigmoid(0) == 0.5 to sum(p) and nothing else.
        sum_p = jnp.sum(sp_acc[...]) - pad_correction
        sum_t = jnp.sum(st_acc[...])
        tp = jnp.sum(tp_acc[...])
        fp = sum_p - tp
        fn = sum_t - tp
        tversky = (tp + smooth) / (tp + alpha * fp + beta * fn + smooth)
        out_ref[...] = jnp.reshape(1.0 - tversky, (1, 1))


def tversky_loss(preds, targets, alpha=0.7, beta=0.3, smooth=1e-6,
                 block_rows=2048):
    assert preds.shape == targets.shape
    # No wrapper-side up-cast: pass native dtype (f32/bf16/...) and cast
    # inside the kernel.  HBM traffic is the binding resource.
    p_flat = preds.reshape(-1)
    t_flat = targets.reshape(-1)
    n = p_flat.shape[0]

    # Block sizing: default 2048 rows x 128 lanes (1 MiB/input in f32, so
    # 2 inputs x 2 pipeline buffers = 4 MiB — comfortably inside the scoped
    # VMEM limit on v5e/v6e/v7x).  Shrink for small inputs so the tail pad
    # stays tiny; block_rows is always a multiple of 8 (sublane tiling).
    rows_needed = -(-n // LANES)
    rows_rounded = ((rows_needed + SUBLANES - 1) // SUBLANES) * SUBLANES
    block_rows = max(SUBLANES, min(int(block_rows) // SUBLANES * SUBLANES,
                                   rows_rounded))
    rows_padded = ((rows_needed + block_rows - 1) // block_rows) * block_rows
    pad = rows_padded * LANES - n

    if pad > 0:
        # Zero-pad in native dtype; corrected exactly in the finalize step.
        p_flat = jnp.pad(p_flat, (0, pad))
        t_flat = jnp.pad(t_flat, (0, pad))

    p2d = p_flat.reshape(rows_padded, LANES)
    t2d = t_flat.reshape(rows_padded, LANES)
    grid = (rows_padded // block_rows,)

    kernel = functools.partial(
        _tversky_kernel,
        float(alpha), float(beta), float(smooth), 0.5 * float(pad))

    out = pl.pallas_call(
        kernel,
        out_shape=jax.ShapeDtypeStruct((1, 1), jnp.float32),
        grid_spec=pltpu.PrefetchScalarGridSpec(
            num_scalar_prefetch=0,
            grid=grid,
            in_specs=[
                pl.BlockSpec((block_rows, LANES), lambda i: (i, 0)),
                pl.BlockSpec((block_rows, LANES), lambda i: (i, 0)),
            ],
            out_specs=pl.BlockSpec((1, 1), lambda i: (0, 0)),
            scratch_shapes=[
                pltpu.VMEM((SUBLANES, LANES), jnp.float32),   # sum(p)
                pltpu.VMEM((SUBLANES, LANES), jnp.float32),   # sum(t)
                pltpu.VMEM((SUBLANES, LANES), jnp.float32),   # sum(p*t)
            ],
        ),
        # Reduction carried in scratch across the grid => axis is "arbitrary".
        # TODO(synk): on v7x, emit per-core partial sums over a parallel axis
        # so both TensorCores stream disjoint halves.
        compiler_params=pltpu.CompilerParams(
            dimension_semantics=("arbitrary",)),
    )(p2d, t2d)
    return out[0, 0]


def _reference(preds, targets, alpha=0.7, beta=0.3, smooth=1e-6):
    p = jax.nn.sigmoid(preds.astype(jnp.float32)).reshape(-1)
    t = targets.astype(jnp.float32).reshape(-1)
    tp = jnp.sum(p * t)
    fn = jnp.sum((1.0 - p) * t)
    fp = jnp.sum(p * (1.0 - t))
    return 1.0 - (tp + smooth) / (tp + alpha * fp + beta * fn + smooth)


if __name__ == "__main__":
    key = jax.random.PRNGKey(0)
    k1, k2 = jax.random.split(key)
    # Small NCHW shapes: batch=2, channels=4, spatial=16x16
    preds = jax.random.normal(k1, (2, 4, 16, 16), dtype=jnp.float32)
    targets = (jax.random.uniform(k2, (2, 4, 16, 16)) > 0.5).astype(jnp.float32)

    loss = tversky_loss(preds, targets)
    jax.block_until_ready(loss)

    ref = _reference(preds, targets)
    assert jnp.allclose(loss, ref, atol=1e-5, rtol=1e-5), (loss, ref)
    print("KERNEL_OK")
</pallas_src>

<mosaic_0001>
module attributes {stable_mosaic.version = 11 : i64} {
  func.func @_tversky_kernel(%arg0: i32, %arg1: memref<16x128xf32, #tpu.memory_space<vmem>>, %arg2: memref<16x128xf32, #tpu.memory_space<vmem>>, %arg3: memref<1x1xf32, #tpu.memory_space<vmem>>, %arg4: memref<8x128xf32, #tpu.memory_space<vmem>>, %arg5: memref<8x128xf32, #tpu.memory_space<vmem>>, %arg6: memref<8x128xf32, #tpu.memory_space<vmem>>) attributes {dimension_semantics = [#tpu.dimension_semantics<arbitrary>], iteration_bounds = array<i64: 1>, scalar_prefetch = 0 : i64, scratch_operands = 3 : i64, tpu.core_type = #tpu.core_type<tc>, window_params = [{transform_indices = @transform_0, window_bounds = array<i64: 16, 128>}, {transform_indices = @transform_1, window_bounds = array<i64: 16, 128>}, {pipeline_mode = #tpu.pipeline_mode<synchronous>, transform_indices = @transform_2, window_bounds = array<i64: 1, 1>}]} {
    %c0_i32 = arith.constant 0 : i32
    %0 = arith.cmpi eq, %arg0, %c0_i32 : i32
    %1 = arith.extui %0 : i1 to i32
    %c0_i32_0 = arith.constant 0 : i32
    %2 = arith.cmpi ne, %1, %c0_i32_0 : i32
    scf.if %2 {
      %cst_21 = arith.constant 0.000000e+00 : f32
      %28 = vector.broadcast %cst_21 : f32 to vector<8x128xf32>
      %c0_22 = arith.constant 0 : index
      %c0_23 = arith.constant 0 : index
      %29 = vector.load %arg4[%c0_22, %c0_23] : memref<8x128xf32, #tpu.memory_space<vmem>>, vector<8x128xf32>
      tpu.vector_store %arg4[%c0_22, %c0_23], %28 {strides = array<i32>} : memref<8x128xf32, #tpu.memory_space<vmem>>, vector<8x128xf32>,
      %cst_24 = arith.constant 0.000000e+00 : f32
      %30 = vector.broadcast %cst_24 : f32 to vector<8x128xf32>
      %c0_25 = arith.constant 0 : index
      %c0_26 = arith.constant 0 : index
      %31 = vector.load %arg5[%c0_25, %c0_26] : memref<8x128xf32, #tpu.memory_space<vmem>>, vector<8x128xf32>
      tpu.vector_store %arg5[%c0_25, %c0_26], %30 {strides = array<i32>} : memref<8x128xf32, #tpu.memory_space<vmem>>, vector<8x128xf32>,
      %cst_27 = arith.constant 0.000000e+00 : f32
      %32 = vector.broadcast %cst_27 : f32 to vector<8x128xf32>
      %c0_28 = arith.constant 0 : index
      %c0_29 = arith.constant 0 : index
      %33 = vector.load %arg6[%c0_28, %c0_29] : memref<8x128xf32, #tpu.memory_space<vmem>>, vector<8x128xf32>
      tpu.vector_store %arg6[%c0_28, %c0_29], %32 {strides = array<i32>} : memref<8x128xf32, #tpu.memory_space<vmem>>, vector<8x128xf32>,
    } else {
    }
    %c0 = arith.constant 0 : index
    %c0_1 = arith.constant 0 : index
    %3 = vector.load %arg1[%c0, %c0_1] : memref<16x128xf32, #tpu.memory_space<vmem>>, vector<16x128xf32>
    %4 = arith.negf %3 : vector<16x128xf32>
    %5 = math.exp %4 : vector<16x128xf32>
    %cst = arith.constant 1.000000e+00 : f32
    %6 = vector.broadcast %cst : f32 to vector<16x128xf32>
    %7 = arith.addf %6, %5 : vector<16x128xf32>
    %8 = arith.divf %6, %7 : vector<16x128xf32>
    %c0_2 = arith.constant 0 : index
    %c0_3 = arith.constant 0 : index
    %9 = vector.load %arg2[%c0_2, %c0_3] : memref<16x128xf32, #tpu.memory_space<vmem>>, vector<16x128xf32>
    %10 = vector.shape_cast %8 : vector<16x128xf32> to vector<2x8x128xf32>
    %11 = vector.shape_cast %9 : vector<16x128xf32> to vector<2x8x128xf32>
    %c0_4 = arith.constant 0 : index
    %c0_5 = arith.constant 0 : index
    %12 = vector.load %arg4[%c0_4, %c0_5] : memref<8x128xf32, #tpu.memory_space<vmem>>, vector<8x128xf32>
    %cst_6 = arith.constant dense<0.000000e+00> : vector<8x128xf32>
    %13 = vector.multi_reduction <add>, %10, %cst_6 [0] : vector<2x8x128xf32> to vector<8x128xf32>
    %14 = arith.addf %12, %13 : vector<8x128xf32>
    %c0_7 = arith.constant 0 : index
    %c0_8 = arith.constant 0 : index
    %15 = vector.load %arg4[%c0_7, %c0_8] : memref<8x128xf32, #tpu.memory_space<vmem>>, vector<8x128xf32>
    tpu.vector_store %arg4[%c0_7, %c0_8], %14 {strides = array<i32>} : memref<8x128xf32, #tpu.memory_space<vmem>>, vector<8x128xf32>,
    %c0_9 = arith.constant 0 : index
    %c0_10 = arith.constant 0 : index
    %16 = vector.load %arg5[%c0_9, %c0_10] : memref<8x128xf32, #tpu.memory_space<vmem>>, vector<8x128xf32>
    %cst_11 = arith.constant dense<0.000000e+00> : vector<8x128xf32>
    %17 = vector.multi_reduction <add>, %11, %cst_11 [0] : vector<2x8x128xf32> to vector<8x128xf32>
    %18 = arith.addf %16, %17 : vector<8x128xf32>
    %c0_12 = arith.constant 0 : index
    %c0_13 = arith.constant 0 : index
    %19 = vector.load %arg5[%c0_12, %c0_13] : memref<8x128xf32, #tpu.memory_space<vmem>>, vector<8x128xf32>
    tpu.vector_store %arg5[%c0_12, %c0_13], %18 {strides = array<i32>} : memref<8x128xf32, #tpu.memory_space<vmem>>, vector<8x128xf32>,
    %c0_14 = arith.constant 0 : index
    %c0_15 = arith.constant 0 : index
    %20 = vector.load %arg6[%c0_14, %c0_15] : memref<8x128xf32, #tpu.memory_space<vmem>>, vector<8x128xf32>
    %21 = arith.mulf %10, %11 : vector<2x8x128xf32>
    %cst_16 = arith.constant dense<0.000000e+00> : vector<8x128xf32>
    %22 = vector.multi_reduction <add>, %21, %cst_16 [0] : vector<2x8x128xf32> to vector<8x128xf32>
    %23 = arith.addf %20, %22 : vector<8x128xf32>
    %c0_17 = arith.constant 0 : index
    %c0_18 = arith.constant 0 : index
    %24 = vector.load %arg6[%c0_17, %c0_18] : memref<8x128xf32, #tpu.memory_space<vmem>>, vector<8x128xf32>
    tpu.vector_store %arg6[%c0_17, %c0_18], %23 {strides = array<i32>} : memref<8x128xf32, #tpu.memory_space<vmem>>, vector<8x128xf32>,
    %c0_i32_19 = arith.constant 0 : i32
    %25 = arith.cmpi eq, %arg0, %c0_i32_19 : i32
    %26 = arith.extui %25 : i1 to i32
    %c0_i32_20 = arith.constant 0 : i32
    %27 = arith.cmpi ne, %26, %c0_i32_20 : i32
    scf.if %27 {
      %c0_21 = arith.constant 0 : index
      %c0_22 = arith.constant 0 : index
      %28 = vector.load %arg4[%c0_21, %c0_22] : memref<8x128xf32, #tpu.memory_space<vmem>>, vector<8x128xf32>
      %29 = vector.shape_cast %28 : vector<8x128xf32> to vector<1x8x128xf32>
      %cst_23 = arith.constant dense<0.000000e+00> : vector<1xf32>
      %30 = vector.multi_reduction <add>, %29, %cst_23 [1, 2] : vector<1x8x128xf32> to vector<1xf32>
      %31 = vector.shape_cast %30 : vector<1xf32> to vector<1x1x1xf32>
      %32 = vector.extract %31[0, 0, 0] : f32 from vector<1x1x1xf32>
      %cst_24 = arith.constant 0.000000e+00 : f32
      %33 = arith.subf %32, %cst_24 : f32
      %c0_25 = arith.constant 0 : index
      %c0_26 = arith.constant 0 : index
      %34 = vector.load %arg5[%c0_25, %c0_26] : memref<8x128xf32, #tpu.memory_space<vmem>>, vector<8x128xf32>
      %35 = vector.shape_cast %34 : vector<8x128xf32> to vector<1x8x128xf32>
      %cst_27 = arith.constant dense<0.000000e+00> : vector<1xf32>
      %36 = vector.multi_reduction <add>, %35, %cst_27 [1, 2] : vector<1x8x128xf32> to vector<1xf32>
      %37 = vector.shape_cast %36 : vector<1xf32> to vector<1x1x1xf32>
      %38 = vector.extract %37[0, 0, 0] : f32 from vector<1x1x1xf32>
      %c0_28 = arith.constant 0 : index
      %c0_29 = arith.constant 0 : index
      %39 = vector.load %arg6[%c0_28, %c0_29] : memref<8x128xf32, #tpu.memory_space<vmem>>, vector<8x128xf32>
      %40 = vector.shape_cast %39 : vector<8x128xf32> to vector<1x8x128xf32>
      %cst_30 = arith.constant dense<0.000000e+00> : vector<1xf32>
      %41 = vector.multi_reduction <add>, %40, %cst_30 [1, 2] : vector<1x8x128xf32> to vector<1xf32>
      %42 = vector.shape_cast %41 : vector<1xf32> to vector<1x1x1xf32>
      %43 = vector.extract %42[0, 0, 0] : f32 from vector<1x1x1xf32>
      %44 = arith.subf %33, %43 : f32
      %45 = arith.subf %38, %43 : f32
      %cst_31 = arith.constant 9.99999997E-7 : f32
      %46 = arith.addf %43, %cst_31 : f32
      %cst_32 = arith.constant 0.699999988 : f32
      %47 = arith.mulf %cst_32, %44 : f32
      %48 = arith.addf %43, %47 : f32
      %cst_33 = arith.constant 3.000000e-01 : f32
      %49 = arith.mulf %cst_33, %45 : f32
      %50 = arith.addf %48, %49 : f32
      %cst_34 = arith.constant 9.99999997E-7 : f32
      %51 = arith.addf %50, %cst_34 : f32
      %52 = arith.divf %46, %51 : f32
      %cst_35 = arith.constant 1.000000e+00 : f32
      %53 = arith.subf %cst_35, %52 : f32
      %54 = vector.broadcast %53 : f32 to vector<1x1xf32>
      %c0_36 = arith.constant 0 : index
      %c0_37 = arith.constant 0 : index
      %55 = vector.load %arg3[%c0_36, %c0_37] : memref<1x1xf32, #tpu.memory_space<vmem>>, vector<1x1xf32>
      tpu.vector_store %arg3[%c0_36, %c0_37], %54 {strides = array<i32>} : memref<1x1xf32, #tpu.memory_space<vmem>>, vector<1x1xf32>,
    } else {
    }
    return
  }
  func.func @transform_0(%arg0: i32) -> (i32, i32) {
    %c0_i32 = arith.constant 0 : i32
    %c0_i32_0 = arith.constant 0 : i32
    return %arg0, %c0_i32 : i32, i32
  }
  func.func @transform_1(%arg0: i32) -> (i32, i32) {
    %c0_i32 = arith.constant 0 : i32
    %c0_i32_0 = arith.constant 0 : i32
    return %arg0, %c0_i32 : i32, i32
  }
  func.func @transform_2(%arg0: i32) -> (i32, i32) {
    %c0_i32 = arith.constant 0 : i32
    %c0_i32_0 = arith.constant 0 : i32
    %c0_i32_1 = arith.constant 0 : i32
    return %c0_i32, %c0_i32_0 : i32, i32
  }
}

</mosaic_0001>

<llo_original>
// kernel: tpu_custom_call.1
$region0: #{tpu_custom_call.1}
  #allocation0 [shape = 'u32[]', space=smem, size = 0x4, offset = 0x4, fixed_abs, tag = 'smem constant byte address 0x4 - core index']
  #allocation1 [shape = 'u32[144,128]{1,0:T(1,128)}', space=vmem, size = 0x12000, scoped, tag = 'internal scratch']
  #allocation2 [shape = 'f32[8,128]{1,0:T(8,128)}', space=vmem, size = 0x1000, scoped, tag = 'scratch operand']
  #allocation3 [shape = 'f32[8,128]{1,0:T(8,128)}', space=vmem, size = 0x1000, scoped, tag = 'scratch operand']
  #allocation4 [shape = 'f32[8,128]{1,0:T(8,128)}', space=vmem, size = 0x1000, scoped, tag = 'scratch operand']
  %s0 = inlined_call_operand.hbm [shape: f32[16,128], index: 0, kind: input, shape index: {}]
  %s1 = inlined_call_operand.hbm [shape: f32[16,128], index: 1, kind: input, shape index: {}]
  %s2 = inlined_call_operand.hbm [shape: f32[1,1], index: 2, kind: output, shape index: {}]
  %s3 = sld [smem:[#allocation0]]
  $region34: #{tpu_custom_call.1} parent=0
    _
  %s5 = ssub.s32 1, %s3
  %s6 = scalar_select 0, %s5, %s3
  $region1: #{tpu_custom_call.1} parent=0
    #allocation5 [shape = 'u8[8192]{0}', space=vmem, size = 0x2000, scoped, tag = 'input window, operand 0, single buffered']
    #allocation6 [shape = 's32[1]{0}', space=sflag, size = 0x4, scoped, tag = 'scoped memory for tpu_custom_call.1']
    #allocation7 [shape = 's32[1]{0}', space=sflag, size = 0x4, scoped, tag = 'scoped memory for tpu_custom_call.1']
    #allocation8 [shape = 'u8[8192]{0}', space=vmem, size = 0x2000, scoped, tag = 'input window, operand 1, single buffered']
    #allocation9 [shape = 's32[1]{0}', space=sflag, size = 0x4, scoped, tag = 'scoped memory for tpu_custom_call.1']
    #allocation10 [shape = 'u8[512]{0}', space=vmem, size = 0x400, scoped, tag = 'output window, operand 0, single buffered']
    %7 = vsyncpa [#allocation6], 0
    %8 = vsyncpa [#allocation9], 0
    %9 = vsyncpa [#allocation7], 0
    // Predicated region
    $region2: #{tpu_custom_call.1} parent=1 // pred_check
      _
    $region3: #{tpu_custom_call.1} parent=1 // pred_check_branch
      %11 = sbr.rel (0) target = $region5
    $region4: #{tpu_custom_call.1} parent=1 // pred_region
      %s13 = ssub.s32 256, 256
      %14 = vsyncadd [#allocation6], %s13
      %s15 = sshll.u32 [#allocation5], 4
      %s16 = int_to_ptr.vmem [resolvable:$true] %s15
      %21 = dma.hbm_to_vmem [thread:$0]  %s0, 256, %s16, [#allocation6], 128, 128, 8
    $region5: #{tpu_custom_call.1} parent=1 // pred_fallthru
      _
    // Predicated region
    $region6: #{tpu_custom_call.1} parent=1 // pred_check
      _
    $region7: #{tpu_custom_call.1} parent=1 // pred_check_branch
      %23 = sbr.rel (0) target = $region9
    $region8: #{tpu_custom_call.1} parent=1 // pred_region
      %s25 = ssub.s32 256, 256
      %26 = vsyncadd [#allocation9], %s25
      %s27 = sshll.u32 [#allocation8], 4
      %s28 = int_to_ptr.vmem [resolvable:$true] %s27
      %33 = dma.hbm_to_vmem [thread:$0]  %s1, 256, %s28, [#allocation9], 128, 128, 8
    $region9: #{tpu_custom_call.1} parent=1 // pred_fallthru
      _
    // Predicated region
    $region10: #{tpu_custom_call.1} parent=1 // pred_check
      _
    $region11: #{tpu_custom_call.1} parent=1 // pred_check_branch
      %35 = sbr.rel (0) target = $region13
    $region12: #{tpu_custom_call.1} parent=1 // pred_region
      %36 = dma.done [#allocation6], 256
    $region13: #{tpu_custom_call.1} parent=1 // pred_fallthru
      _
    // Predicated region
    $region14: #{tpu_custom_call.1} parent=1 // pred_check
      _
    $region15: #{tpu_custom_call.1} parent=1 // pred_check_branch
      %38 = sbr.rel (0) target = $region17
    $region16: #{tpu_custom_call.1} parent=1 // pred_region
      %39 = dma.done [#allocation9], 256
    $region17: #{tpu_custom_call.1} parent=1 // pred_fallthru
      _
    %p40 = scmp.eq.s32.totalorder 0, 0
    // Predicated region
    $region18: #{tpu_custom_call.1} parent=1 // pred_check
      %p41 = pneg %p40
    $region19: #{tpu_custom_call.1} parent=1 // pred_check_branch
      %43 = sbr.rel (%p41) target = $region21
    $region20: #{tpu_custom_call.1} parent=1 // pred_region
      %44 = vst [vmem:[#allocation2] sm:$0xff] 0.0
      %45 = vst [vmem:[#allocation3] sm:$0xff] 0.0
      %46 = vst [vmem:[#allocation4] sm:$0xff] 0.0
    $region21: #{tpu_custom_call.1} parent=1 // pred_fallthru
      _
    %v47 = vld [vmem:[#allocation5] sm:$0xff]
    %v48 = vld [vmem:[#allocation5 + $0x8] sm:$0xff]
    %v49 = vxor.u32 %v47, 2147483648
    %v50 = vxor.u32 %v48, 2147483648
    %v51 = vmul.f32 %v49, 1.442695
    %v52 = vpow.pop %v51
    %v53 = vmul.f32 %v50, 1.442695
    %v54 = vpow.pop %v53
    %v55 = vadd.f32 %v52, 1.0
    %v56 = vadd.f32 %v54, 1.0
    %v57 = vrcp.pop %v55
    %v58 = vmul.f32 1.0, %v57
    %v59 = vrcp.pop %v56
    %v60 = vmul.f32 1.0, %v59
    %v61 = vld [vmem:[#allocation8] sm:$0xff]
    %v62 = vld [vmem:[#allocation8 + $0x8] sm:$0xff]
    %v63 = vld [vmem:[#allocation2] sm:$0xff]
    %v64 = vadd.f32 %v58, %v60
    %v65 = vadd.f32 %v63, %v64
    %66 = vst [vmem:[#allocation2] sm:$0xff] %v65
    %v67 = vld [vmem:[#allocation3] sm:$0xff]
    %v68 = vadd.f32 %v61, %v62
    %v69 = vadd.f32 %v67, %v68
    %70 = vst [vmem:[#allocation3] sm:$0xff] %v69
    %v71 = vld [vmem:[#allocation4] sm:$0xff]
    %v72 = vmul.f32 %v58, %v61
    %v73 = vmul.f32 %v60, %v62
    %v74 = vadd.f32 %v72, %v73
    %v75 = vadd.f32 %v71, %v74
    %76 = vst [vmem:[#allocation4] sm:$0xff] %v75
    // Predicated region
    $region22: #{tpu_custom_call.1} parent=1 // pred_check
      %p77 = pneg %p40
    $region23: #{tpu_custom_call.1} parent=1 // pred_check_branch
      %79 = sbr.rel (%p77) target = $region25
    $region24: #{tpu_custom_call.1} parent=1 // pred_region
      %v80 = vld [vmem:[#allocation2] sm:$0xff]
      %81 = vadd.xlane.f32.xlu0 %v80
      %v82 = vpop.xlane.xlu0 %81
      %v83 = vrot.slane %v82, 4
      %v84 = vadd.f32 %v82, %v83
      %v85 = vrot.slane %v84, 2
      %v86 = vadd.f32 %v84, %v85
      %v87 = vrot.slane %v86, 1
      %v88 = vadd.f32 %v86, %v87
      %s89 = vtos %v88
      %v90 = vld [vmem:[#allocation3] sm:$0xff]
      %91 = vadd.xlane.f32.xlu0 %v90
      %v92 = vpop.xlane.xlu0 %91
      %v93 = vrot.slane %v92, 4
      %v94 = vadd.f32 %v92, %v93
      %v95 = vrot.slane %v94, 2
      %v96 = vadd.f32 %v94, %v95
      %v97 = vrot.slane %v96, 1
      %v98 = vadd.f32 %v96, %v97
      %s99 = vtos %v98
      %v100 = vld [vmem:[#allocation4] sm:$0xff]
      %101 = vadd.xlane.f32.xlu0 %v100
      %v102 = vpop.xlane.xlu0 %101
      %v103 = vrot.slane %v102, 4
      %v104 = vadd.f32 %v102, %v103
      %v105 = vrot.slane %v104, 2
      %v106 = vadd.f32 %v104, %v105
      %v107 = vrot.slane %v106, 1
      %v108 = vadd.f32 %v106, %v107
      %s109 = vtos %v108
      %s110 = ssub.f32 %s89, %s109
      %s111 = ssub.f32 %s99, %s109
      %s112 = sadd.f32 %s109, 1e-06
      %s113 = smul.f32 %s110, 0.7
      %s114 = sadd.f32 %s109, %s113
      %s115 = smul.f32 %s111, 0.3
      %s116 = sadd.f32 %s114, %s115
      %s117 = sadd.f32 %s116, 1e-06
      %v118 = vstv %s117
      %v119 = vrcp.pop %v118
      %s120 = vtos %v119
      %s121 = smul.f32 %s112, %s120
      %s122 = ssub.f32 1.0, %s121
      %v123 = vstv %s122
      %vm124 = vcmask 0
      %125 = vst.msk [vmem:[#allocation10] sm:$0x1] %vm124, %v123
    $region25: #{tpu_custom_call.1} parent=1 // pred_fallthru
      _
    // Predicated region
    $region26: #{tpu_custom_call.1} parent=1 // pred_check
      _
    $region27: #{tpu_custom_call.1} parent=1 // pred_check_branch
      %127 = sbr.rel (0) target = $region29
    $region28: #{tpu_custom_call.1} parent=1 // pred_region
      %s129 = ssub.s32 16, 16
      %130 = vsyncadd [#allocation7], %s129
      %s132 = sshll.u32 [#allocation10], 4
      %s133 = int_to_ptr.vmem [resolvable:$true] %s132
      %135 = dma.vmem_to_hbm [thread:$0]  %s133, 16, %s2, [#allocation7]
    $region29: #{tpu_custom_call.1} parent=1 // pred_fallthru
      _
    // Predicated region
    $region30: #{tpu_custom_call.1} parent=1 // pred_check
      _
    $region31: #{tpu_custom_call.1} parent=1 // pred_check_branch
      %137 = sbr.rel (0) target = $region33
    $region32: #{tpu_custom_call.1} parent=1 // pred_region
      %138 = dma.done [#allocation7], 16
    $region33: #{tpu_custom_call.1} parent=1 // pred_fallthru
      _
    %139 = vsyncpa [#allocation6], 1
    %140 = vsyncpa [#allocation9], 1
    %141 = vsyncpa [#allocation7], 1

</llo_original>
